<compile_context>
chip_gen: v6e
topology: v6e:2x2x1
jax: 0.10.0
libtpu: 0.0.40
codegen_flags: <defaults>
</compile_context>

<pallas_src>
import functools

import jax
import jax.numpy as jnp
from jax.experimental import pallas as pl
from jax.experimental.pallas import tpu as pltpu


def _linear_kernel(x_ref, w_ref, b_ref, o_ref):
    """One batch tile of y = x @ W.T + b (out_features == 1).

    x_ref: (TB, K) VMEM (f32 or bf16)
    w_ref: (1, K)  f32 VMEM, resident (same block every grid step)
    b_ref: (1, 1)  f32 SMEM scalar
    o_ref: (TB, 1) VMEM
    """
    x = x_ref[...].astype(jnp.float32)   # bf16 callers: upcast for f32 accumulate
    w = w_ref[...]                       # (1, K) broadcasts over rows (VPU mul)
    # Per-row dot product: VPU multiply + XLU cross-lane reduce, exact f32.
    acc = jnp.sum(x * w, axis=-1, keepdims=True)            # (TB, 1)
    o_ref[...] = (acc + b_ref[0, 0]).astype(o_ref.dtype)


def _pick_batch_tile(B: int, tb_max: int) -> int:
    """Batch tile: multiple of 8 when tiling; >=2 grid steps whenever B > 8."""
    if B <= 8:
        return B  # single full block; full-array dims are exempt from (8,128)
    # Round ceil(B/2) UP to a multiple of 8 so two blocks always cover B:
    # guarantees >= 2 grid steps (v7x dual-TC sharding) even when B fits one tile.
    half = (((B + 1) // 2) + 7) // 8 * 8
    tb = min(tb_max, half)
    tb = max(8, (tb // 8) * 8)  # force multiple of 8 even for odd tb_max values
    return tb


@functools.partial(jax.jit, static_argnames=("tb_max",))
def lclubnet_forward(x, weight, bias, *, tb_max=8192):
    """Pallas implementation of LClubNet.forward: x -> linear_1(x).

    x: (B, 69) f32/bf16, weight: (1, 69) f32, bias: (1,) f32 -> (B, 1).
    """
    B, K = x.shape
    O, Kw = weight.shape
    assert K == Kw and O == 1

    TB = _pick_batch_tile(B, int(tb_max))
    grid = (pl.cdiv(B, TB),)

    bias2d = bias.reshape(1, 1).astype(jnp.float32)
    weight = weight.astype(jnp.float32)
    out_dtype = jnp.promote_types(x.dtype, jnp.float32)

    # Double-buffered VMEM footprint: the x tile (K=69 pads to 128 lanes) and the
    # (TB, 1) output tile (also 128-lane padded) dominate.  Derive the scoped
    # VMEM limit from TB so big tiles clear v5e's 16 MiB default; cap at v7x's
    # 64 MiB physical per-TC budget.
    vmem_needed = 2 * 2 * TB * 128 * 4          # 2 arrays x 2 buffers, f32 worst case
    vmem_limit = max(16 << 20, min(vmem_needed + (4 << 20), 64 << 20))

    return pl.pallas_call(
        _linear_kernel,
        out_shape=jax.ShapeDtypeStruct((B, O), out_dtype),
        grid=grid,
        in_specs=[
            # x: tiled along batch -> BlockSpec double-buffering overlaps DMA/compute.
            pl.BlockSpec((TB, K), lambda i: (i, 0)),
            # weight: tiny, same block index every step -> stays resident in VMEM.
            pl.BlockSpec((O, K), lambda i: (0, 0)),
            # bias: scalar in SMEM.
            pl.BlockSpec(memory_space=pltpu.SMEM),
        ],
        out_specs=pl.BlockSpec((TB, O), lambda i: (i, 0)),
        compiler_params=pltpu.CompilerParams(
            # Batch tiles are independent: shard across the two TCs on v7x;
            # harmless sequential loop on single-TC v5e/v6e.
            dimension_semantics=("parallel",),
            vmem_limit_bytes=vmem_limit,
        ),
    )(x, weight, bias2d)


if __name__ == "__main__":
    key = jax.random.PRNGKey(0)
    kx, kw, kb, kx2, kx3 = jax.random.split(key, 5)

    IN, OUT = 69, 1

    # Deterministic synthetic parameters (shapes from nn.Linear(69, 1)).
    bound = 1.0 / jnp.sqrt(jnp.float32(IN))
    weight = jax.random.uniform(kw, (OUT, IN), jnp.float32, -bound, bound)
    bias = jax.random.uniform(kb, (OUT,), jnp.float32, -bound, bound)

    # Case 1: small batch, default tiling -> TB=8, grid=(2,)  (exercises the
    # ">=2 grid steps" rule and multi-step pipelining even at tiny B).
    B1 = 16
    x1 = jax.random.normal(kx, (B1, IN), jnp.float32)
    y1 = jax.block_until_ready(lclubnet_forward(x1, weight, bias))
    ref1 = x1 @ weight.T + bias
    assert y1.shape == (B1, OUT)
    assert jnp.allclose(y1, ref1, atol=1e-5, rtol=1e-5)

    # Case 2: odd batch + small tile cap -> TB=16, grid=(3,), ragged last block.
    B2 = 37
    x2 = jax.random.normal(kx2, (B2, IN), jnp.float32)
    y2 = jax.block_until_ready(lclubnet_forward(x2, weight, bias, tb_max=16))
    ref2 = x2 @ weight.T + bias
    assert y2.shape == (B2, OUT)
    assert jnp.allclose(y2, ref2, atol=1e-5, rtol=1e-5)

    # Case 3: bf16 activations (halves HBM bytes; kernel upcasts to f32).
    B3 = 64
    x3 = jax.random.normal(kx3, (B3, IN), jnp.float32)
    y3 = jax.block_until_ready(lclubnet_forward(x3.astype(jnp.bfloat16), weight, bias))
    ref3 = x3 @ weight.T + bias
    assert y3.shape == (B3, OUT)
    assert jnp.allclose(y3, ref3, atol=1e-2, rtol=1e-2)

    print("KERNEL_OK")
</pallas_src>

<mosaic_0001>
module attributes {stable_mosaic.version = 11 : i64} {
  func.func @_linear_kernel(%arg0: i32, %arg1: memref<8x69xf32, #tpu.memory_space<vmem>>, %arg2: memref<1x69xf32, #tpu.memory_space<vmem>>, %arg3: memref<1x1xf32, #tpu.memory_space<smem>>, %arg4: memref<8x1xf32, #tpu.memory_space<vmem>>) attributes {dimension_semantics = [#tpu.dimension_semantics<parallel>], iteration_bounds = array<i64: 2>, scalar_prefetch = 0 : i64, scratch_operands = 0 : i64, tpu.core_type = #tpu.core_type<tc>, window_params = [{transform_indices = @transform_0, window_bounds = array<i64: 8, 69>}, {pipeline_mode = #tpu.pipeline_mode<synchronous>, transform_indices = @transform_1, window_bounds = array<i64: 1, 69>}, {transform_indices = @transform_2, window_bounds = array<i64: 1, 1>}, {transform_indices = @transform_3, window_bounds = array<i64: 8, 1>}]} {
    %c0 = arith.constant 0 : index
    %c0_0 = arith.constant 0 : index
    %0 = vector.load %arg1[%c0, %c0_0] : memref<8x69xf32, #tpu.memory_space<vmem>>, vector<8x69xf32>
    %c0_1 = arith.constant 0 : index
    %c0_2 = arith.constant 0 : index
    %1 = vector.load %arg2[%c0_1, %c0_2] : memref<1x69xf32, #tpu.memory_space<vmem>>, vector<1x69xf32>
    %2 = vector.broadcast %1 : vector<1x69xf32> to vector<8x69xf32>
    %3 = arith.mulf %0, %2 : vector<8x69xf32>
    %cst = arith.constant dense<0.000000e+00> : vector<8xf32>
    %4 = vector.multi_reduction <add>, %3, %cst [1] : vector<8x69xf32> to vector<8xf32>
    %5 = vector.shape_cast %4 : vector<8xf32> to vector<8x1xf32>
    %c0_3 = arith.constant 0 : index
    %c0_4 = arith.constant 0 : index
    %6 = memref.load %arg3[%c0_3, %c0_4] : memref<1x1xf32, #tpu.memory_space<smem>>
    %7 = vector.broadcast %6 : f32 to vector<8x1xf32>
    %8 = arith.addf %5, %7 : vector<8x1xf32>
    %c0_5 = arith.constant 0 : index
    %c0_6 = arith.constant 0 : index
    %9 = vector.load %arg4[%c0_5, %c0_6] : memref<8x1xf32, #tpu.memory_space<vmem>>, vector<8x1xf32>
    tpu.vector_store %arg4[%c0_5, %c0_6], %8 {strides = array<i32>} : memref<8x1xf32, #tpu.memory_space<vmem>>, vector<8x1xf32>,
    return
  }
  func.func @transform_0(%arg0: i32) -> (i32, i32) {
    %c0_i32 = arith.constant 0 : i32
    %c0_i32_0 = arith.constant 0 : i32
    return %arg0, %c0_i32 : i32, i32
  }
  func.func @transform_1(%arg0: i32) -> (i32, i32) {
    %c0_i32 = arith.constant 0 : i32
    %c0_i32_0 = arith.constant 0 : i32
    %c0_i32_1 = arith.constant 0 : i32
    return %c0_i32, %c0_i32_0 : i32, i32
  }
  func.func @transform_2(%arg0: i32) -> (i32, i32) {
    %c0_i32 = arith.constant 0 : i32
    %c0_i32_0 = arith.constant 0 : i32
    %c0_i32_1 = arith.constant 0 : i32
    return %c0_i32, %c0_i32_0 : i32, i32
  }
  func.func @transform_3(%arg0: i32) -> (i32, i32) {
    %c0_i32 = arith.constant 0 : i32
    %c0_i32_0 = arith.constant 0 : i32
    return %arg0, %c0_i32 : i32, i32
  }
}

</mosaic_0001>

<llo_original>
// kernel: lclubnet_forward.1
$region0: #{lclubnet_forward.1}
  #allocation0 [shape = 'u32[]', space=smem, size = 0x4, offset = 0x4, fixed_abs, tag = 'smem constant byte address 0x4 - core index']
  #allocation1 [shape = 'u32[144,128]{1,0:T(1,128)}', space=vmem, size = 0x12000, scoped, tag = 'internal scratch']
  #allocation2 [shape = 'f32[1,1]{1,0:T(1,128)S(6)}', space=smem, size = 0x200, scoped, tag = 'scoped memory for lclubnet_forward.1']
  %s0 = inlined_call_operand.hbm [shape: f32[16,69], index: 0, kind: input, shape index: {}]
  %s1 = inlined_call_operand.vmem [shape: f32[1,69], index: 1, kind: input, shape index: {}]
  %s2 = inlined_call_operand.<no memory space> [shape: f32[1,1], index: 2, kind: input, shape index: {}]
  %s3 = inlined_call_operand.vmem [shape: f32[16,1], index: 3, kind: output, shape index: {}]
  %s4 = sld [smem:[#allocation0]]
  $region49: #{lclubnet_forward.1} parent=0
    _
  %s6 = ssub.s32 1, %s4
  %s7 = scalar_select 0, %s6, %s4
  %8 = sst [smem:[#allocation2]] %s2
  $region1: #{lclubnet_forward.1} parent=0
    #allocation3 [shape = 'u8[8192]{0}', space=vmem, size = 0x2000, scoped, tag = 'input window, operand 0']
    #allocation4 [shape = 's32[2]{0}', space=sflag, size = 0x8, scoped, tag = 'scoped memory for lclubnet_forward.1']
    %9 = vsyncpa [#allocation4], 0
    %s10 = scalar_lea.sflag [#allocation4], 1
    %11 = vsyncpa %s10, 0
    loop: start=0, step=1, limit=4
    $region2: #{lclubnet_forward.1} parent=1 // loop_pre_header
      _
    $region3: #{lclubnet_forward.1} parent=1 // loop_header
      %s13 = sphi 0, %s17
      %p14 = scmp.ge.s32.totalorder %s13, 4
      %s23 = sphi 0, %s25
      %s26 = sphi 0, %s23
      %s27 = sphi 0, %s26
      %s43 = sphi 0, %s27
      %s47 = sphi 0, %s47
      %s49 = sphi 0, %s47
      %s50 = sphi 0, %s49
      %s64 = sphi 0, %s50
      %s68 = sphi 0, %s68
      %s70 = sphi 0, %s68
      %s71 = sphi 0, %s70
      %s85 = sphi 0, %s71
      %s91 = sphi 0, %s93
      %s94 = sphi 0, %s91
      %s95 = sphi 0, %s94
      %s111 = sphi 0, %s95
    $region4: #{lclubnet_forward.1} parent=1 // loop_header_branch
      %16 = sbr.rel (%p14) target = $region8
    $region5: #{lclubnet_forward.1} parent=1 // loop_body
      %s18 = ssub.s32 %s13, 1
      %s19 = ssub.s32 %s13, 2
      %s20 = sadd.s32 %s13, 1
      %s21 = ssub.s32 %s13, %s20
      %p22 = scmp.eq.s32.totalorder %s21, 0
      %s24 = sadd.s32 %s23, 1
      %s25 = scalar_select %p22, %s23, %s24
      %p28 = pneg %p22
      %p29 = scmp.eq.s32.totalorder %s13, 1
      %p30 = por %p28, %p29
      %p31 = scmp.ne.s32.totalorder %s23, %s26
      %p32 = scmp.eq.s32.totalorder %s13, 0
      %p33 = por %p31, %p32
      %p34 = scmp.ne.s32.totalorder %s23, %s26
      %p35 = scmp.eq.s32.totalorder %s18, 1
      %p36 = por %p34, %p35
      %p37 = scmp.ne.s32.totalorder %s26, %s27
      %p38 = scmp.eq.s32.totalorder %s18, 0
      %p39 = por %p37, %p38
      %p40 = scmp.ne.s32.totalorder %s26, %s27
      %p41 = scmp.eq.s32.totalorder %s19, 1
      %p42 = por %p40, %p41
      %p44 = scmp.ne.s32.totalorder %s27, %s43
      %p45 = scmp.eq.s32.totalorder %s19, 0
      %p46 = por %p44, %p45
      %s48 = sadd.s32 %s47, 1
      %p51 = scmp.eq.s32.totalorder %s13, 1
      %p52 = scmp.ne.s32.totalorder %s47, %s49
      %p53 = scmp.eq.s32.totalorder %s13, 0
      %p54 = por %p52, %p53
      %p55 = scmp.ne.s32.totalorder %s47, %s49
      %p56 = scmp.eq.s32.totalorder %s18, 1
      %p57 = por %p55, %p56
      %p58 = scmp.ne.s32.totalorder %s49, %s50
      %p59 = scmp.eq.s32.totalorder %s18, 0
      %p60 = por %p58, %p59
      %p61 = scmp.ne.s32.totalorder %s49, %s50
      %p62 = scmp.eq.s32.totalorder %s19, 1
      %p63 = por %p61, %p62
      %p65 = scmp.ne.s32.totalorder %s50, %s64
      %p66 = scmp.eq.s32.totalorder %s19, 0
      %p67 = por %p65, %p66
      %s69 = sadd.s32 %s68, 1
      %p72 = scmp.eq.s32.totalorder %s13, 1
      %p73 = scmp.ne.s32.totalorder %s68, %s70
      %p74 = scmp.eq.s32.totalorder %s13, 0
      %p75 = por %p73, %p74
      %p76 = scmp.ne.s32.totalorder %s68, %s70
      %p77 = scmp.eq.s32.totalorder %s18, 1
      %p78 = por %p76, %p77
      %p79 = scmp.ne.s32.totalorder %s70, %s71
      %p80 = scmp.eq.s32.totalorder %s18, 0
      %p81 = por %p79, %p80
      %p82 = scmp.ne.s32.totalorder %s70, %s71
      %p83 = scmp.eq.s32.totalorder %s19, 1
      %p84 = por %p82, %p83
      %p86 = scmp.ne.s32.totalorder %s71, %s85
      %p87 = scmp.eq.s32.totalorder %s19, 0
      %p88 = por %p86, %p87
      %s89 = ssub.s32 %s13, %s20
      %p90 = scmp.eq.s32.totalorder %s89, 0
      %s92 = sadd.s32 %s91, 1
      %s93 = scalar_select %p90, %s91, %s92
      %p96 = pneg %p90
      %p97 = scmp.eq.s32.totalorder %s13, 1
      %p98 = por %p96, %p97
      %p99 = scmp.ne.s32.totalorder %s91, %s94
      %p100 = scmp.eq.s32.totalorder %s13, 0
      %p101 = por %p99, %p100
      %p102 = scmp.ne.s32.totalorder %s91, %s94
      %p103 = scmp.eq.s32.totalorder %s18, 1
      %p104 = por %p102, %p103
      %p105 = scmp.ne.s32.totalorder %s94, %s95
      %p106 = scmp.eq.s32.totalorder %s18, 0
      %p107 = por %p105, %p106
      %p108 = scmp.ne.s32.totalorder %s94, %s95
      %p109 = scmp.eq.s32.totalorder %s19, 1
      %p110 = por %p108, %p109
      %p112 = scmp.ne.s32.totalorder %s95, %s111
      %p113 = scmp.eq.s32.totalorder %s19, 0
      %p114 = por %p112, %p113
      %p115 = scmp.le.s32.totalorder 1, %s13
      %p116 = scmp.lt.s32.totalorder %s13, 3
      %p117 = pnand %p115, %p116
      %p118 = pneg %p117
      // Predicated region
      $region9: #{lclubnet_forward.1} parent=5 // pred_check
        _
      $region10: #{lclubnet_forward.1} parent=5 // pred_check_branch
        %120 = sbr.rel (%p117) target = $region12
      $region11: #{lclubnet_forward.1} parent=5 // pred_region
        %s121 = ssub.s32 %s13, 1
        // Predicated region
        $region13: #{lclubnet_forward.1} parent=11 // pred_check
          %p122 = pneg %p60
        $region14: #{lclubnet_forward.1} parent=11 // pred_check_branch
          %124 = sbr.rel (%p122) target = $region16
        $region15: #{lclubnet_forward.1} parent=11 // pred_region
          _
        $region16: #{lclubnet_forward.1} parent=11 // pred_fallthru
          _
        // Predicated region
        $region17: #{lclubnet_forward.1} parent=11 // pred_check
          %p125 = pneg %p81
        $region18: #{lclubnet_forward.1} parent=11 // pred_check_branch
          %127 = sbr.rel (%p125) target = $region20
        $region19: #{lclubnet_forward.1} parent=11 // pred_region
          _
        $region20: #{lclubnet_forward.1} parent=11 // pred_fallthru
          _
      $region12: #{lclubnet_forward.1} parent=5 // pred_fallthru
        _
      %p128 = scmp.lt.s32.totalorder %s13, 2
      // Predicated region
      $region21: #{lclubnet_forward.1} parent=5 // pred_check
        %p129 = pneg %p128
      $region22: #{lclubnet_forward.1} parent=5 // pred_check_branch
        %131 = sbr.rel (%p129) target = $region24
      $region23: #{lclubnet_forward.1} parent=5 // pred_region
        // Predicated region
        $region25: #{lclubnet_forward.1} parent=23 // pred_check
          %p132 = pneg %p33
        $region26: #{lclubnet_forward.1} parent=23 // pred_check_branch
          %134 = sbr.rel (%p132) target = $region28
        $region27: #{lclubnet_forward.1} parent=23 // pred_region
          %s135 = sand.u32 %s23, 1
          %s136 = scalar_lea.sflag [#allocation4], %s135
          %s137 = sand.u32 %s23, 1
          %s138 = smul.addr %s137, 8
          %s139 = scalar_lea.vmem [#allocation3], %s138
          %s141 = ssub.s32 128, 128
          %142 = vsyncadd %s136, %s141
          %s143 = smul.addr %s13, 128
          %s144 = scalar_lea.hbm %s0, %s143
          %s146 = sshll.u32 %s139, 4
          %s147 = int_to_ptr.vmem [resolvable:$true] %s146
          %149 = dma.hbm_to_vmem [thread:$0]  %s144, 128, %s147, %s136
        $region28: #{lclubnet_forward.1} parent=23 // pred_fallthru
          _
      $region24: #{lclubnet_forward.1} parent=5 // pred_fallthru
        _
      %p150 = scmp.le.s32.totalorder 1, %s13
      %p151 = scmp.lt.s32.totalorder %s13, 3
      %p152 = pnand %p150, %p151
      %p153 = pneg %p152
      // Predicated region
      $region29: #{lclubnet_forward.1} parent=5 // pred_check
        _
      $region30: #{lclubnet_forward.1} parent=5 // pred_check_branch
        %155 = sbr.rel (%p152) target = $region32
      $region31: #{lclubnet_forward.1} parent=5 // pred_region
        %s156 = ssub.s32 %s13, 1
        %s157 = sand.u32 %s26, 1
        %s158 = scalar_lea.sflag [#allocation4], %s157
        %s159 = sand.u32 %s26, 1
        %s160 = smul.addr %s159, 8
        %s161 = scalar_lea.vmem [#allocation3], %s160
        // Predicated region
        $region33: #{lclubnet_forward.1} parent=31 // pred_check
          %p162 = pneg %p39
        $region34: #{lclubnet_forward.1} parent=31 // pred_check_branch
          %164 = sbr.rel (%p162) target = $region36
        $region35: #{lclubnet_forward.1} parent=31 // pred_region
          %165 = dma.done %s158, 128
        $region36: #{lclubnet_forward.1} parent=31 // pred_fallthru
          _
        %s166 = sand.u32 %s26, 1
        %s167 = scalar_lea.sflag [#allocation4], %s166
        %s168 = sand.u32 %s26, 1
        %s169 = smul.addr %s168, 8
        %s170 = scalar_lea.vmem [#allocation3], %s169
        %p171 = pneg %p39
        %p172 = pneg %p36
        %p173 = pneg %p60
        %p174 = pneg %p57
        %p175 = pneg %p81
        %p176 = pneg %p78
        %p177 = pneg %p107
        %p178 = pneg %p104
        %p179 = scmp.lt.s32.totalorder %s18, 1
        %s180 = scalar_select %p179, %s18, 1
        %s181 = smul.addr %s180, 8
        %s182 = scalar_lea.vmem %s3, %s181
        %p183 = scmp.lt.s32.totalorder %s18, 1
        %s184 = scalar_select %p183, %s18, 1
        %s185 = smul.addr %s184, 8
        %s186 = scalar_lea.vmem %s3, %s185
        %v187 = vld [vmem:[%s161] sm:$0xff]
        %v188 = vld [vmem:[%s1] sm:$0x1]
        %v190 = vlaneseq
        %v191 = vshrl.u32 %v190, 7
        %v192 = vsub.s32 0, %v191
        %v193 = vrot.slane %v188, %v192
        %v195 = vmul.f32 %v187, %v193
        %vm196 = vcmask 564224
        %v197 = vsel %vm196, %v195, 0.0
        %198 = vadd.xlane.f32.xlu0 %v197
        %v199 = vpop.xlane.xlu0 %198
        %s200 = sld [smem:[#allocation2]]
        %v201 = vstv %s200
        %v202 = vadd.f32 %v199, %v201
        %vm203 = vcmask 7168
        %204 = vst.msk [vmem:[%s186] sm:$0xff] %vm203, %v202
        %p205 = scmp.lt.s32.totalorder %s18, 1
        %s206 = scalar_select %p205, %s18, 1
        %s207 = smul.addr %s206, 8
        %s208 = scalar_lea.vmem %s3, %s207
        // Predicated region
        $region37: #{lclubnet_forward.1} parent=31 // pred_check
          %p209 = pneg %p104
        $region38: #{lclubnet_forward.1} parent=31 // pred_check_branch
          %211 = sbr.rel (%p209) target = $region40
        $region39: #{lclubnet_forward.1} parent=31 // pred_region
          _
        $region40: #{lclubnet_forward.1} parent=31 // pred_fallthru
          _
      $region32: #{lclubnet_forward.1} parent=5 // pred_fallthru
        _
      %p212 = scmp.le.s32.totalorder 2, %s13
      // Predicated region
      $region41: #{lclubnet_forward.1} parent=5 // pred_check
        %p213 = pneg %p212
      $region42: #{lclubnet_forward.1} parent=5 // pred_check_branch
        %215 = sbr.rel (%p213) target = $region44
      $region43: #{lclubnet_forward.1} parent=5 // pred_region
        %s216 = ssub.s32 %s13, 2
        // Predicated region
        $region45: #{lclubnet_forward.1} parent=43 // pred_check
          %p217 = pneg %p110
        $region46: #{lclubnet_forward.1} parent=43 // pred_check_branch
          %219 = sbr.rel (%p217) target = $region48
        $region47: #{lclubnet_forward.1} parent=43 // pred_region
          %p220 = scmp.lt.s32.totalorder %s19, 1
          %s221 = scalar_select %p220, %s19, 1
          %s222 = smul.addr %s221, 8
          %s223 = scalar_lea.vmem %s3, %s222
        $region48: #{lclubnet_forward.1} parent=43 // pred_fallthru
          _
      $region44: #{lclubnet_forward.1} parent=5 // pred_fallthru
        _
    $region6: #{lclubnet_forward.1} parent=1 // loop_footer
      %s17 = sadd.s32 1, %s13
    $region7: #{lclubnet_forward.1} parent=1 // loop_footer_branch
      %12 = sbr.rel target = $region3
    $region8: #{lclubnet_forward.1} parent=1 // loop_exit
      _
    %224 = vsyncpa [#allocation4], 1
    %s225 = scalar_lea.sflag [#allocation4], 1
    %226 = vsyncpa %s225, 1

</llo_original>
